<compile_context>
chip_gen: v7x
topology: tpu7x:2x2x1
jax: 0.10.0
libtpu: 0.0.40
codegen_flags: <defaults>
</compile_context>

<pallas_src>
import jax
import jax.numpy as jnp
from jax import lax
from jax.experimental import pallas as pl
from jax.experimental.pallas import tpu as pltpu


def inception_kernel(x_ref, w_ref, o_ref):
    # x_ref: (TM, K_pad)   im2col rows (includes a constant-1 bias column)
    # w_ref: (K_pad, C_pad) fused 1x1/3x3/5x5 weights + bias row (zero-padded)
    # o_ref: (TM, C_pad)   lane-dense output tile
    o_ref[...] = jnp.dot(
        x_ref[...], w_ref[...], preferred_element_type=jnp.float32
    ).astype(o_ref.dtype)


def _pick_row_tile(rows):
    # Largest tile that divides `rows`, is a multiple of 8, and leaves at
    # least 2 grid steps (so a "parallel" axis exists for both v7x TCs).
    for tm in (512, 256, 128, 64, 32, 16, 8):
        if rows % tm == 0 and rows // tm >= 2:
            return tm
    return rows  # full-extent fallback (always a legal block shape)


def _inception_block_impl(x_nchw, params):
    """x_nchw: (N, Cin, H, W) float32.  Returns (N, 3*Cout, H, W)."""
    w1, b1, w3, b3, w5, b5 = params
    N, Cin, H, W = x_nchw.shape
    Cout = w1.shape[0]
    C3 = 3 * Cout

    # ---- fused weight: single 5x5 conv producing all 3*Cout channels ----
    # PyTorch conv weight (Cout, Cin, K, K) -> (K, K, Cin, Cout) slices of the
    # fused (5, 5, Cin, 3*Cout) tensor.
    W_f = jnp.zeros((5, 5, Cin, C3), jnp.float32)
    W_f = W_f.at[2, 2, :, 0:Cout].set(jnp.transpose(w1[:, :, 0, 0], (1, 0)))
    W_f = W_f.at[1:4, 1:4, :, Cout:2 * Cout].set(jnp.transpose(w3, (2, 3, 1, 0)))
    W_f = W_f.at[:, :, :, 2 * Cout:3 * Cout].set(jnp.transpose(w5, (2, 3, 1, 0)))

    K = 25 * Cin                      # im2col contraction size
    K_pad = pl.cdiv(K + 1, 128) * 128  # +1 for the folded-bias column
    C_pad = pl.cdiv(C3, 128) * 128     # lane-dense output channels

    W_full = jnp.zeros((K_pad, C_pad), jnp.float32)
    W_full = W_full.at[:K, :C3].set(W_f.reshape(K, C3))
    bias_f = jnp.concatenate([b1, b3, b5]).astype(jnp.float32)
    W_full = W_full.at[K, :C3].set(bias_f)   # bias row (pairs with ones column)

    # ---- im2col in the wrapper (layout plumbing -> lane-dense kernel input) ----
    x_nhwc = jnp.transpose(x_nchw, (0, 2, 3, 1))                 # (N, H, W, Cin)
    x_pad = jnp.pad(x_nhwc, ((0, 0), (2, 2), (2, 2), (0, 0)))    # pad=2 frame
    taps = [x_pad[:, ky:ky + H, kx:kx + W, :]
            for ky in range(5) for kx in range(5)]               # 25 x (N,H,W,Cin)
    x_col = jnp.stack(taps, axis=3).reshape(N * H * W, K)        # (R, 25*Cin)

    R = N * H * W
    ones_col = jnp.ones((R, 1), x_col.dtype)
    pad_cols = jnp.zeros((R, K_pad - K - 1), x_col.dtype)
    x_col = jnp.concatenate([x_col, ones_col, pad_cols], axis=1)  # (R, K_pad)

    TM = _pick_row_tile(R)

    out_flat = pl.pallas_call(
        inception_kernel,
        out_shape=jax.ShapeDtypeStruct((R, C_pad), x_nchw.dtype),
        grid=(R // TM,),
        in_specs=[
            pl.BlockSpec((TM, K_pad), lambda i: (i, 0)),
            # constant index_map -> fused weight stays resident in VMEM
            pl.BlockSpec((K_pad, C_pad), lambda i: (0, 0)),
        ],
        out_specs=pl.BlockSpec((TM, C_pad), lambda i: (i, 0)),
        compiler_params=pltpu.CompilerParams(
            dimension_semantics=("parallel",),
            vmem_limit_bytes=32 * 1024 * 1024,  # safe on v7x's smaller VMEM
        ),
    )(x_col, W_full)

    # Slice off the lane padding, back to NCHW (matches torch.cat(dim=1)).
    out_nhwc = out_flat[:, :C3].reshape(N, H, W, C3)
    return jnp.transpose(out_nhwc, (0, 3, 1, 2))


inception_block = jax.jit(_inception_block_impl)


def reference_inception(x_nchw, params):
    """Pure-JAX reference using lax.conv (NCHW, matches PyTorch exactly)."""
    w1, b1, w3, b3, w5, b5 = params

    def conv(x, w, b, pad):
        y = lax.conv_general_dilated(
            x, w, window_strides=(1, 1), padding=((pad, pad), (pad, pad)),
            dimension_numbers=("NCHW", "OIHW", "NCHW"))
        return y + b.reshape(1, -1, 1, 1)

    return jnp.concatenate(
        [conv(x_nchw, w1, b1, 0), conv(x_nchw, w3, b3, 1), conv(x_nchw, w5, b5, 2)],
        axis=1)


def init_params(key, in_channels, out_channels):
    """Deterministic synthetic parameters with PyTorch conv weight shapes."""
    ks = jax.random.split(key, 6)
    w1 = jax.random.normal(ks[0], (out_channels, in_channels, 1, 1), jnp.float32) * 0.1
    b1 = jax.random.normal(ks[1], (out_channels,), jnp.float32) * 0.1
    w3 = jax.random.normal(ks[2], (out_channels, in_channels, 3, 3), jnp.float32) * 0.1
    b3 = jax.random.normal(ks[3], (out_channels,), jnp.float32) * 0.1
    w5 = jax.random.normal(ks[4], (out_channels, in_channels, 5, 5), jnp.float32) * 0.1
    b5 = jax.random.normal(ks[5], (out_channels,), jnp.float32) * 0.1
    return (w1, b1, w3, b3, w5, b5)


if __name__ == "__main__":
    key = jax.random.PRNGKey(0)
    k_x, k_p = jax.random.split(key)

    N, Cin, H, W = 2, 4, 16, 16
    Cout = 8

    x = jax.random.normal(k_x, (N, Cin, H, W), jnp.float32)
    params = init_params(k_p, Cin, Cout)

    out = jax.block_until_ready(inception_block(x, params))
    ref = jax.block_until_ready(reference_inception(x, params))

    assert out.shape == (N, 3 * Cout, H, W), out.shape
    assert jnp.allclose(out, ref, atol=1e-3, rtol=1e-3), float(
        jnp.max(jnp.abs(out - ref)))

    print("KERNEL_OK")
</pallas_src>

<mosaic_0001>
module attributes {stable_mosaic.version = 11 : i64} {
  func.func @inception_kernel(%arg0: i32, %arg1: memref<256x128xf32, #tpu.memory_space<vmem>>, %arg2: memref<128x128xf32, #tpu.memory_space<vmem>>, %arg3: memref<256x128xf32, #tpu.memory_space<vmem>>) attributes {dimension_semantics = [#tpu.dimension_semantics<parallel>], iteration_bounds = array<i64: 2>, scalar_prefetch = 0 : i64, scratch_operands = 0 : i64, tpu.core_type = #tpu.core_type<tc>, window_params = [{transform_indices = @transform_0, window_bounds = array<i64: 256, 128>}, {pipeline_mode = #tpu.pipeline_mode<synchronous>, transform_indices = @transform_1, window_bounds = array<i64: 128, 128>}, {transform_indices = @transform_2, window_bounds = array<i64: 256, 128>}]} {
    %c0 = arith.constant 0 : index
    %c0_0 = arith.constant 0 : index
    %0 = vector.load %arg1[%c0, %c0_0] : memref<256x128xf32, #tpu.memory_space<vmem>>, vector<256x128xf32>
    %c0_1 = arith.constant 0 : index
    %c0_2 = arith.constant 0 : index
    %1 = vector.load %arg2[%c0_1, %c0_2] : memref<128x128xf32, #tpu.memory_space<vmem>>, vector<128x128xf32>
    %cst = arith.constant dense<0.000000e+00> : vector<256x128xf32>
    %2 = tpu.matmul %0, %1, %cst {dimension_numbers = #tpu.dot_dimension_numbers<[1], [0], [0], [1], [0, 0, 1, 1], [], []>} : vector<256x128xf32>, vector<128x128xf32>, vector<256x128xf32> -> vector<256x128xf32>
    %c0_3 = arith.constant 0 : index
    %c0_4 = arith.constant 0 : index
    %3 = vector.load %arg3[%c0_3, %c0_4] : memref<256x128xf32, #tpu.memory_space<vmem>>, vector<256x128xf32>
    tpu.vector_store %arg3[%c0_3, %c0_4], %2 {strides = array<i32>} : memref<256x128xf32, #tpu.memory_space<vmem>>, vector<256x128xf32>,
    return
  }
  func.func @transform_0(%arg0: i32) -> (i32, i32) {
    %c0_i32 = arith.constant 0 : i32
    %c0_i32_0 = arith.constant 0 : i32
    return %arg0, %c0_i32 : i32, i32
  }
  func.func @transform_1(%arg0: i32) -> (i32, i32) {
    %c0_i32 = arith.constant 0 : i32
    %c0_i32_0 = arith.constant 0 : i32
    %c0_i32_1 = arith.constant 0 : i32
    return %c0_i32, %c0_i32_0 : i32, i32
  }
  func.func @transform_2(%arg0: i32) -> (i32, i32) {
    %c0_i32 = arith.constant 0 : i32
    %c0_i32_0 = arith.constant 0 : i32
    return %arg0, %c0_i32 : i32, i32
  }
}

</mosaic_0001>

<llo_original>
// kernel: _inception_block_impl.1
$region0: #{_inception_block_impl.1}
  #allocation0 [shape = 'u32[]', space=smem, size = 0x4, offset = 0x4, fixed_abs, tag = 'smem constant byte address 0x4 - core index']
  #allocation1 [shape = 'u32[144,128]{1,0:T(1,128)}', space=vmem, size = 0x12000, scoped, tag = 'internal scratch']
  %s0 = inlined_call_operand.vmem [shape: f32[512,128], index: 0, kind: input, shape index: {}]
  %s1 = inlined_call_operand.vmem [shape: f32[128,128], index: 1, kind: input, shape index: {}]
  %s2 = inlined_call_operand.hbm [shape: f32[512,128], index: 2, kind: output, shape index: {}]
  %s3 = sld [smem:[#allocation0]]
  $region41: #{_inception_block_impl.1} parent=0
    _
  %s5 = ssub.s32 1, %s3
  %s6 = scalar_select 0, %s5, %s3
  $region1: #{_inception_block_impl.1} parent=0
    #allocation2 [shape = 'u8[262144]{0}', space=vmem, size = 0x40000, scoped, tag = 'output window, operand 0']
    #allocation3 [shape = 's32[2]{0}', space=sflag, size = 0x8, scoped, tag = 'scoped memory for _inception_block_impl.1']
    %7 = vsyncpa [#allocation3], 0
    %s8 = scalar_lea.sflag [#allocation3], 1
    %9 = vsyncpa %s8, 0
    loop: start=0, step=1, limit=4
    $region2: #{_inception_block_impl.1} parent=1 // loop_pre_header
      _
    $region3: #{_inception_block_impl.1} parent=1 // loop_header
      %s11 = sphi 0, %s15
      %p12 = scmp.ge.s32.totalorder %s11, 4
      %s21 = sphi 0, %s23
      %s24 = sphi 0, %s21
      %s25 = sphi 0, %s24
      %s41 = sphi 0, %s25
      %s45 = sphi 0, %s45
      %s47 = sphi 0, %s45
      %s48 = sphi 0, %s47
      %s62 = sphi 0, %s48
      %s68 = sphi 0, %s70
      %s71 = sphi 0, %s68
      %s72 = sphi 0, %s71
      %s88 = sphi 0, %s72
    $region4: #{_inception_block_impl.1} parent=1 // loop_header_branch
      %14 = sbr.rel (%p12) target = $region8
    $region5: #{_inception_block_impl.1} parent=1 // loop_body
      %s16 = ssub.s32 %s11, 1
      %s17 = ssub.s32 %s11, 2
      %s18 = sadd.s32 %s11, 1
      %s19 = ssub.s32 %s11, %s18
      %p20 = scmp.eq.s32.totalorder %s19, 0
      %s22 = sadd.s32 %s21, 1
      %s23 = scalar_select %p20, %s21, %s22
      %p26 = pneg %p20
      %p27 = scmp.eq.s32.totalorder %s11, 1
      %p28 = por %p26, %p27
      %p29 = scmp.ne.s32.totalorder %s21, %s24
      %p30 = scmp.eq.s32.totalorder %s11, 0
      %p31 = por %p29, %p30
      %p32 = scmp.ne.s32.totalorder %s21, %s24
      %p33 = scmp.eq.s32.totalorder %s16, 1
      %p34 = por %p32, %p33
      %p35 = scmp.ne.s32.totalorder %s24, %s25
      %p36 = scmp.eq.s32.totalorder %s16, 0
      %p37 = por %p35, %p36
      %p38 = scmp.ne.s32.totalorder %s24, %s25
      %p39 = scmp.eq.s32.totalorder %s17, 1
      %p40 = por %p38, %p39
      %p42 = scmp.ne.s32.totalorder %s25, %s41
      %p43 = scmp.eq.s32.totalorder %s17, 0
      %p44 = por %p42, %p43
      %s46 = sadd.s32 %s45, 1
      %p49 = scmp.eq.s32.totalorder %s11, 1
      %p50 = scmp.ne.s32.totalorder %s45, %s47
      %p51 = scmp.eq.s32.totalorder %s11, 0
      %p52 = por %p50, %p51
      %p53 = scmp.ne.s32.totalorder %s45, %s47
      %p54 = scmp.eq.s32.totalorder %s16, 1
      %p55 = por %p53, %p54
      %p56 = scmp.ne.s32.totalorder %s47, %s48
      %p57 = scmp.eq.s32.totalorder %s16, 0
      %p58 = por %p56, %p57
      %p59 = scmp.ne.s32.totalorder %s47, %s48
      %p60 = scmp.eq.s32.totalorder %s17, 1
      %p61 = por %p59, %p60
      %p63 = scmp.ne.s32.totalorder %s48, %s62
      %p64 = scmp.eq.s32.totalorder %s17, 0
      %p65 = por %p63, %p64
      %s66 = ssub.s32 %s11, %s18
      %p67 = scmp.eq.s32.totalorder %s66, 0
      %s69 = sadd.s32 %s68, 1
      %s70 = scalar_select %p67, %s68, %s69
      %p73 = pneg %p67
      %p74 = scmp.eq.s32.totalorder %s11, 1
      %p75 = por %p73, %p74
      %p76 = scmp.ne.s32.totalorder %s68, %s71
      %p77 = scmp.eq.s32.totalorder %s11, 0
      %p78 = por %p76, %p77
      %p79 = scmp.ne.s32.totalorder %s68, %s71
      %p80 = scmp.eq.s32.totalorder %s16, 1
      %p81 = por %p79, %p80
      %p82 = scmp.ne.s32.totalorder %s71, %s72
      %p83 = scmp.eq.s32.totalorder %s16, 0
      %p84 = por %p82, %p83
      %p85 = scmp.ne.s32.totalorder %s71, %s72
      %p86 = scmp.eq.s32.totalorder %s17, 1
      %p87 = por %p85, %p86
      %p89 = scmp.ne.s32.totalorder %s72, %s88
      %p90 = scmp.eq.s32.totalorder %s17, 0
      %p91 = por %p89, %p90
      %p92 = scmp.le.s32.totalorder 1, %s11
      %p93 = scmp.lt.s32.totalorder %s11, 3
      %p94 = pnand %p92, %p93
      %p95 = pneg %p94
      // Predicated region
      $region9: #{_inception_block_impl.1} parent=5 // pred_check
        _
      $region10: #{_inception_block_impl.1} parent=5 // pred_check_branch
        %97 = sbr.rel (%p94) target = $region12
      $region11: #{_inception_block_impl.1} parent=5 // pred_region
        %s98 = ssub.s32 %s11, 1
        // Predicated region
        $region13: #{_inception_block_impl.1} parent=11 // pred_check
          %p99 = pneg %p58
        $region14: #{_inception_block_impl.1} parent=11 // pred_check_branch
          %101 = sbr.rel (%p99) target = $region16
        $region15: #{_inception_block_impl.1} parent=11 // pred_region
          _
        $region16: #{_inception_block_impl.1} parent=11 // pred_fallthru
          _
      $region12: #{_inception_block_impl.1} parent=5 // pred_fallthru
        _
      %p102 = scmp.lt.s32.totalorder %s11, 2
      // Predicated region
      $region17: #{_inception_block_impl.1} parent=5 // pred_check
        %p103 = pneg %p102
      $region18: #{_inception_block_impl.1} parent=5 // pred_check_branch
        %105 = sbr.rel (%p103) target = $region20
      $region19: #{_inception_block_impl.1} parent=5 // pred_region
        // Predicated region
        $region21: #{_inception_block_impl.1} parent=19 // pred_check
          %p106 = pneg %p31
        $region22: #{_inception_block_impl.1} parent=19 // pred_check_branch
          %108 = sbr.rel (%p106) target = $region24
        $region23: #{_inception_block_impl.1} parent=19 // pred_region
          %s109 = smul.u32 32, %s11
          %p110 = scmp.lt.s32.totalorder %s109, 63
          %s111 = scalar_select %p110, %s109, 63
          %s112 = smul.addr %s111, 8
          %s113 = scalar_lea.vmem %s0, %s112
          %s114 = smul.u32 32, %s11
        $region24: #{_inception_block_impl.1} parent=19 // pred_fallthru
          _
      $region20: #{_inception_block_impl.1} parent=5 // pred_fallthru
        _
      %p115 = scmp.le.s32.totalorder 1, %s11
      %p116 = scmp.lt.s32.totalorder %s11, 3
      %p117 = pnand %p115, %p116
      %p118 = pneg %p117
      // Predicated region
      $region25: #{_inception_block_impl.1} parent=5 // pred_check
        _
      $region26: #{_inception_block_impl.1} parent=5 // pred_check_branch
        %120 = sbr.rel (%p117) target = $region28
      $region27: #{_inception_block_impl.1} parent=5 // pred_region
        %s121 = ssub.s32 %s11, 1
        %s122 = smul.u32 32, %s16
        %p123 = scmp.lt.s32.totalorder %s122, 63
        %s124 = scalar_select %p123, %s122, 63
        %s125 = smul.addr %s124, 8
        %s126 = scalar_lea.vmem %s0, %s125
        %p127 = pneg %p37
        %p128 = pneg %p34
        %p129 = pneg %p58
        %p130 = pneg %p55
        %p131 = pneg %p84
        %p132 = pneg %p81
        %s133 = sand.u32 %s71, 1
        %s134 = scalar_lea.sflag [#allocation3], %s133
        %s135 = sand.u32 %s71, 1
        %s136 = smul.addr %s135, 256
        %s137 = scalar_lea.vmem [#allocation2], %s136
        %s138 = smul.u32 32, %s16
        %p139 = scmp.lt.s32.totalorder %s138, 63
        %s140 = scalar_select %p139, %s138, 63
        %s141 = smul.addr %s140, 8
        %s142 = scalar_lea.vmem %s0, %s141
        %s143 = smul.u32 32, %s16
        %s144 = smul.u32 32, %s16
        %v145 = vld [vmem:[%s142] sm:$0xff]
        %v146 = vld [vmem:[%s142 + $0x8] sm:$0xff]
        %v147 = vld [vmem:[%s142 + $0x10] sm:$0xff]
        %v148 = vld [vmem:[%s142 + $0x18] sm:$0xff]
        %v149 = vld [vmem:[%s142 + $0x20] sm:$0xff]
        %v150 = vld [vmem:[%s142 + $0x28] sm:$0xff]
        %v151 = vld [vmem:[%s142 + $0x30] sm:$0xff]
        %v152 = vld [vmem:[%s142 + $0x38] sm:$0xff]
        %v153 = vld [vmem:[%s142 + $0x40] sm:$0xff]
        %v154 = vld [vmem:[%s142 + $0x48] sm:$0xff]
        %v155 = vld [vmem:[%s142 + $0x50] sm:$0xff]
        %v156 = vld [vmem:[%s142 + $0x58] sm:$0xff]
        %v157 = vld [vmem:[%s142 + $0x60] sm:$0xff]
        %v158 = vld [vmem:[%s142 + $0x68] sm:$0xff]
        %v159 = vld [vmem:[%s142 + $0x70] sm:$0xff]
        %v160 = vld [vmem:[%s142 + $0x78] sm:$0xff]
        %v161 = vld [vmem:[%s142 + $0x80] sm:$0xff]
        %v162 = vld [vmem:[%s142 + $0x88] sm:$0xff]
        %v163 = vld [vmem:[%s142 + $0x90] sm:$0xff]
        %v164 = vld [vmem:[%s142 + $0x98] sm:$0xff]
        %v165 = vld [vmem:[%s142 + $0xa0] sm:$0xff]
        %v166 = vld [vmem:[%s142 + $0xa8] sm:$0xff]
        %v167 = vld [vmem:[%s142 + $0xb0] sm:$0xff]
        %v168 = vld [vmem:[%s142 + $0xb8] sm:$0xff]
        %v169 = vld [vmem:[%s142 + $0xc0] sm:$0xff]
        %v170 = vld [vmem:[%s142 + $0xc8] sm:$0xff]
        %v171 = vld [vmem:[%s142 + $0xd0] sm:$0xff]
        %v172 = vld [vmem:[%s142 + $0xd8] sm:$0xff]
        %v173 = vld [vmem:[%s142 + $0xe0] sm:$0xff]
        %v174 = vld [vmem:[%s142 + $0xe8] sm:$0xff]
        %v175 = vld [vmem:[%s142 + $0xf0] sm:$0xff]
        %v176 = vld [vmem:[%s142 + $0xf8] sm:$0xff]
        %v177 = vld [vmem:[%s1] sm:$0xff]
        %v178 = vld [vmem:[%s1 + $0x8] sm:$0xff]
        %v179 = vld [vmem:[%s1 + $0x10] sm:$0xff]
        %v180 = vld [vmem:[%s1 + $0x18] sm:$0xff]
        %v181 = vld [vmem:[%s1 + $0x20] sm:$0xff]
        %v182 = vld [vmem:[%s1 + $0x28] sm:$0xff]
        %v183 = vld [vmem:[%s1 + $0x30] sm:$0xff]
        %v184 = vld [vmem:[%s1 + $0x38] sm:$0xff]
        %v185 = vld [vmem:[%s1 + $0x40] sm:$0xff]
        %v186 = vld [vmem:[%s1 + $0x48] sm:$0xff]
        %v187 = vld [vmem:[%s1 + $0x50] sm:$0xff]
        %v188 = vld [vmem:[%s1 + $0x58] sm:$0xff]
        %v189 = vld [vmem:[%s1 + $0x60] sm:$0xff]
        %v190 = vld [vmem:[%s1 + $0x68] sm:$0xff]
        %v191 = vld [vmem:[%s1 + $0x70] sm:$0xff]
        %v192 = vld [vmem:[%s1 + $0x78] sm:$0xff]
        %193 = vmatprep.subr.mxu0 0.0
        %194 = vmatpush1.msra.mxu0 %v177
        %195 = vmatprep.subr.mxu0 0.0
        %196 = vmatpush1.msra.mxu0 %v178
        %197 = vmatprep.subr.mxu0 0.0
        %198 = vmatpush1.msra.mxu0 %v179
        %199 = vmatprep.subr.mxu0 0.0
        %200 = vmatpush1.msra.mxu0 %v180
        %201 = vmatprep.subr.mxu0 0.0
        %202 = vmatpush1.msra.mxu0 %v181
        %203 = vmatprep.subr.mxu0 0.0
        %204 = vmatpush1.msra.mxu0 %v182
        %205 = vmatprep.subr.mxu0 0.0
        %206 = vmatpush1.msra.mxu0 %v183
        %207 = vmatprep.subr.mxu0 0.0
        %208 = vmatpush1.msra.mxu0 %v184
        %209 = vmatprep.subr.mxu0 0.0
        %210 = vmatpush1.msra.mxu0 %v185
        %211 = vmatprep.subr.mxu0 0.0
        %212 = vmatpush1.msra.mxu0 %v186
        %213 = vmatprep.subr.mxu0 0.0
        %214 = vmatpush1.msra.mxu0 %v187
        %215 = vmatprep.subr.mxu0 0.0
        %216 = vmatpush1.msra.mxu0 %v188
        %217 = vmatprep.subr.mxu0 0.0
        %218 = vmatpush1.msra.mxu0 %v189
        %219 = vmatprep.subr.mxu0 0.0
        %220 = vmatpush1.msra.mxu0 %v190
        %221 = vmatprep.subr.mxu0 0.0
        %222 = vmatpush1.msra.mxu0 %v191
        %223 = vmatprep.subr.mxu0 0.0
        %224 = vmatpush1.msra.mxu0 %v192
        %225 = vmatprep.subr.mxu0 0.0
        %226 = vmatpush1.msra.mxu0 0.0
        %227 = vmatprep.subr.mxu0 0.0
        %228 = vmatpush1.msra.mxu0 0.0
        %229 = vmatprep.subr.mxu0 0.0
        %230 = vmatpush1.msra.mxu0 0.0
        %231 = vmatprep.subr.mxu0 0.0
        %232 = vmatpush1.msra.mxu0 0.0
        %233 = vmatprep.subr.mxu0 0.0
        %234 = vmatpush1.msra.mxu0 0.0
        %235 = vmatprep.subr.mxu0 0.0
        %236 = vmatpush1.msra.mxu0 0.0
        %237 = vmatprep.subr.mxu0 0.0
        %238 = vmatpush1.msra.mxu0 0.0
        %239 = vmatprep.subr.mxu0 0.0
        %240 = vmatpush1.msra.mxu0 0.0
        %241 = vmatprep.subr.mxu0 0.0
        %242 = vmatpush1.msra.mxu0 0.0
        %243 = vmatprep.subr.mxu0 0.0
        %244 = vmatpush1.msra.mxu0 0.0
        %245 = vmatprep.subr.mxu0 0.0
        %246 = vmatpush1.msra.mxu0 0.0
        %247 = vmatprep.subr.mxu0 0.0
        %248 = vmatpush1.msra.mxu0 0.0
        %249 = vmatprep.subr.mxu0 0.0
        %250 = vmatpush1.msra.mxu0 0.0
        %251 = vmatprep.subr.mxu0 0.0
        %252 = vmatpush1.msra.mxu0 0.0
        %253 = vmatprep.subr.mxu0 0.0
        %254 = vmatpush1.msra.mxu0 0.0
        %255 = vmatprep.subr.mxu0 0.0
        %256 = vmatpush1.msra.mxu0 0.0
        %257 = vmatprep.mubr.f32.mxu0 0.0
        %258 = vmatmul.mubr.f32.gmra.mrb[0].mxu0 %v145
        %v259 = vpop.f32.mrb[0].mxu0
        %v260 = vadd.f32 0.0, %v259
        %v261 = vpop.f32.mrb[0].mxu0
        %262 = vmatprep.mubr.f32.mxu0 0.0
        %263 = vmatmul.mubr.f32.gmra.mrb[0].mxu0 %v146
        %v264 = vpop.f32.mrb[0].mxu0
        %v265 = vadd.f32 0.0, %v264
        %v266 = vpop.f32.mrb[0].mxu0
        %267 = vmatprep.mubr.f32.mxu0 0.0
        %268 = vmatmul.mubr.f32.gmra.mrb[0].mxu0 %v147
        %v269 = vpop.f32.mrb[0].mxu0
        %v270 = vadd.f32 0.0, %v269
        %v271 = vpop.f32.mrb[0].mxu0
        %272 = vmatprep.mubr.f32.mxu0 0.0
        %273 = vmatmul.mubr.f32.gmra.mrb[0].mxu0 %v148
        %v274 = vpop.f32.mrb[0].mxu0
        %v275 = vadd.f32 0.0, %v274
        %v276 = vpop.f32.mrb[0].mxu0
        %277 = vmatprep.mubr.f32.mxu0 0.0
        %278 = vmatmul.mubr.f32.gmra.mrb[0].mxu0 %v149
        %v279 = vpop.f32.mrb[0].mxu0
        %v280 = vadd.f32 0.0, %v279
        %v281 = vpop.f32.mrb[0].mxu0
        %282 = vmatprep.mubr.f32.mxu0 0.0
        %283 = vmatmul.mubr.f32.gmra.mrb[0].mxu0 %v150
        %v284 = vpop.f32.mrb[0].mxu0
        %v285 = vadd.f32 0.0, %v284
        %v286 = vpop.f32.mrb[0].mxu0
        %287 = vmatprep.mubr.f32.mxu0 0.0
        %288 = vmatmul.mubr.f32.gmra.mrb[0].mxu0 %v151
        %v289 = vpop.f32.mrb[0].mxu0
        %v290 = vadd.f32 0.0, %v289
        %v291 = vpop.f32.mrb[0].mxu0
        %292 = vmatprep.mubr.f32.mxu0 0.0
        %293 = vmatmul.mubr.f32.gmra.mrb[0].mxu0 %v152
        %v294 = vpop.f32.mrb[0].mxu0
        %v295 = vadd.f32 0.0, %v294
        %v296 = vpop.f32.mrb[0].mxu0
        %297 = vmatprep.mubr.f32.mxu0 0.0
        %298 = vmatmul.mubr.f32.gmra.mrb[0].mxu0 %v153
        %v299 = vpop.f32.mrb[0].mxu0
        %v300 = vadd.f32 0.0, %v299
        %v301 = vpop.f32.mrb[0].mxu0
        %302 = vmatprep.mubr.f32.mxu0 0.0
        %303 = vmatmul.mubr.f32.gmra.mrb[0].mxu0 %v154
        %v304 = vpop.f32.mrb[0].mxu0
        %v305 = vadd.f32 0.0, %v304
        %v306 = vpop.f32.mrb[0].mxu0
        %307 = vmatprep.mubr.f32.mxu0 0.0
        %308 = vmatmul.mubr.f32.gmra.mrb[0].mxu0 %v155
        %v309 = vpop.f32.mrb[0].mxu0
        %v310 = vadd.f32 0.0, %v309
        %v311 = vpop.f32.mrb[0].mxu0
        %312 = vmatprep.mubr.f32.mxu0 0.0
        %313 = vmatmul.mubr.f32.gmra.mrb[0].mxu0 %v156
        %v314 = vpop.f32.mrb[0].mxu0
        %v315 = vadd.f32 0.0, %v314
        %v316 = vpop.f32.mrb[0].mxu0
        %317 = vmatprep.mubr.f32.mxu0 0.0
        %318 = vmatmul.mubr.f32.gmra.mrb[0].mxu0 %v157
        %v319 = vpop.f32.mrb[0].mxu0
        %v320 = vadd.f32 0.0, %v319
        %v321 = vpop.f32.mrb[0].mxu0
        %322 = vmatprep.mubr.f32.mxu0 0.0
        %323 = vmatmul.mubr.f32.gmra.mrb[0].mxu0 %v158
        %v324 = vpop.f32.mrb[0].mxu0
        %v325 = vadd.f32 0.0, %v324
        %v326 = vpop.f32.mrb[0].mxu0
        %327 = vmatprep.mubr.f32.mxu0 0.0
        %328 = vmatmul.mubr.f32.gmra.mrb[0].mxu0 %v159
        %v329 = vpop.f32.mrb[0].mxu0
        %v330 = vadd.f32 0.0, %v329
        %v331 = vpop.f32.mrb[0].mxu0
        %332 = vmatprep.mubr.f32.mxu0 0.0
        %333 = vmatmul.mubr.f32.gmra.mrb[0].mxu0 %v160
        %v334 = vpop.f32.mrb[0].mxu0
        %v335 = vadd.f32 0.0, %v334
        %v336 = vpop.f32.mrb[0].mxu0
        %337 = vmatprep.mubr.f32.mxu0 0.0
        %338 = vmatmul.mubr.f32.gmra.mrb[0].mxu0 %v161
        %v339 = vpop.f32.mrb[0].mxu0
        %v340 = vadd.f32 0.0, %v339
        %v341 = vpop.f32.mrb[0].mxu0
        %342 = vmatprep.mubr.f32.mxu0 0.0
        %343 = vmatmul.mubr.f32.gmra.mrb[0].mxu0 %v162
        %v344 = vpop.f32.mrb[0].mxu0
        %v345 = vadd.f32 0.0, %v344
        %v346 = vpop.f32.mrb[0].mxu0
        %347 = vmatprep.mubr.f32.mxu0 0.0
        %348 = vmatmul.mubr.f32.gmra.mrb[0].mxu0 %v163
        %v349 = vpop.f32.mrb[0].mxu0
        %v350 = vadd.f32 0.0, %v349
        %v351 = vpop.f32.mrb[0].mxu0
        %352 = vmatprep.mubr.f32.mxu0 0.0
        %353 = vmatmul.mubr.f32.gmra.mrb[0].mxu0 %v164
        %v354 = vpop.f32.mrb[0].mxu0
        %v355 = vadd.f32 0.0, %v354
        %v356 = vpop.f32.mrb[0].mxu0
        %357 = vmatprep.mubr.f32.mxu0 0.0
        %358 = vmatmul.mubr.f32.gmra.mrb[0].mxu0 %v165
        %v359 = vpop.f32.mrb[0].mxu0
        %v360 = vadd.f32 0.0, %v359
        %v361 = vpop.f32.mrb[0].mxu0
        %362 = vmatprep.mubr.f32.mxu0 0.0
        %363 = vmatmul.mubr.f32.gmra.mrb[0].mxu0 %v166
        %v364 = vpop.f32.mrb[0].mxu0
        %v365 = vadd.f32 0.0, %v364
        %v366 = vpop.f32.mrb[0].mxu0
        %367 = vmatprep.mubr.f32.mxu0 0.0
        %368 = vmatmul.mubr.f32.gmra.mrb[0].mxu0 %v167
        %v369 = vpop.f32.mrb[0].mxu0
        %v370 = vadd.f32 0.0, %v369
        %v371 = vpop.f32.mrb[0].mxu0
        %372 = vmatprep.mubr.f32.mxu0 0.0
        %373 = vmatmul.mubr.f32.gmra.mrb[0].mxu0 %v168
        %v374 = vpop.f32.mrb[0].mxu0
        %v375 = vadd.f32 0.0, %v374
        %v376 = vpop.f32.mrb[0].mxu0
        %377 = vmatprep.mubr.f32.mxu0 0.0
        %378 = vmatmul.mubr.f32.gmra.mrb[0].mxu0 %v169
        %v379 = vpop.f32.mrb[0].mxu0
        %v380 = vadd.f32 0.0, %v379
        %v381 = vpop.f32.mrb[0].mxu0
        %382 = vmatprep.mubr.f32.mxu0 0.0
        %383 = vmatmul.mubr.f32.gmra.mrb[0].mxu0 %v170
        %v384 = vpop.f32.mrb[0].mxu0
        %v385 = vadd.f32 0.0, %v384
        %v386 = vpop.f32.mrb[0].mxu0
        %387 = vmatprep.mubr.f32.mxu0 0.0
        %388 = vmatmul.mubr.f32.gmra.mrb[0].mxu0 %v171
        %v389 = vpop.f32.mrb[0].mxu0
        %v390 = vadd.f32 0.0, %v389
        %v391 = vpop.f32.mrb[0].mxu0
        %392 = vmatprep.mubr.f32.mxu0 0.0
        %393 = vmatmul.mubr.f32.gmra.mrb[0].mxu0 %v172
        %v394 = vpop.f32.mrb[0].mxu0
        %v395 = vadd.f32 0.0, %v394
        %v396 = vpop.f32.mrb[0].mxu0
        %397 = vmatprep.mubr.f32.mxu0 0.0
        %398 = vmatmul.mubr.f32.gmra.mrb[0].mxu0 %v173
        %v399 = vpop.f32.mrb[0].mxu0
        %v400 = vadd.f32 0.0, %v399
        %v401 = vpop.f32.mrb[0].mxu0
        %402 = vmatprep.mubr.f32.mxu0 0.0
        %403 = vmatmul.mubr.f32.gmra.mrb[0].mxu0 %v174
        %v404 = vpop.f32.mrb[0].mxu0
        %v405 = vadd.f32 0.0, %v404
        %v406 = vpop.f32.mrb[0].mxu0
        %407 = vmatprep.mubr.f32.mxu0 0.0
        %408 = vmatmul.mubr.f32.gmra.mrb[0].mxu0 %v175
        %v409 = vpop.f32.mrb[0].mxu0
        %v410 = vadd.f32 0.0, %v409
        %v411 = vpop.f32.mrb[0].mxu0
        %412 = vmatprep.mubr.f32.mxu0 0.0
        %413 = vmatmul.mubr.f32.gmra.mrb[0].mxu0 %v176
        %v414 = vpop.f32.mrb[0].mxu0
        %v415 = vadd.f32 0.0, %v414
        %v416 = vpop.f32.mrb[0].mxu0
        %417 = vdwg.mxu0
        %418 = vst [vmem:[%s137] sm:$0xff] %v260
        %419 = vst [vmem:[%s137 + $0x8] sm:$0xff] %v265
        %420 = vst [vmem:[%s137 + $0x10] sm:$0xff] %v270
        %421 = vst [vmem:[%s137 + $0x18] sm:$0xff] %v275
        %422 = vst [vmem:[%s137 + $0x20] sm:$0xff] %v280
        %423 = vst [vmem:[%s137 + $0x28] sm:$0xff] %v285
        %424 = vst [vmem:[%s137 + $0x30] sm:$0xff] %v290
        %425 = vst [vmem:[%s137 + $0x38] sm:$0xff] %v295
        %426 = vst [vmem:[%s137 + $0x40] sm:$0xff] %v300
        %427 = vst [vmem:[%s137 + $0x48] sm:$0xff] %v305
        %428 = vst [vmem:[%s137 + $0x50] sm:$0xff] %v310
        %429 = vst [vmem:[%s137 + $0x58] sm:$0xff] %v315
        %430 = vst [vmem:[%s137 + $0x60] sm:$0xff] %v320
        %431 = vst [vmem:[%s137 + $0x68] sm:$0xff] %v325
        %432 = vst [vmem:[%s137 + $0x70] sm:$0xff] %v330
        %433 = vst [vmem:[%s137 + $0x78] sm:$0xff] %v335
        %434 = vst [vmem:[%s137 + $0x80] sm:$0xff] %v340
        %435 = vst [vmem:[%s137 + $0x88] sm:$0xff] %v345
        %436 = vst [vmem:[%s137 + $0x90] sm:$0xff] %v350
        %437 = vst [vmem:[%s137 + $0x98] sm:$0xff] %v355
        %438 = vst [vmem:[%s137 + $0xa0] sm:$0xff] %v360
        %439 = vst [vmem:[%s137 + $0xa8] sm:$0xff] %v365
        %440 = vst [vmem:[%s137 + $0xb0] sm:$0xff] %v370
        %441 = vst [vmem:[%s137 + $0xb8] sm:$0xff] %v375
        %442 = vst [vmem:[%s137 + $0xc0] sm:$0xff] %v380
        %443 = vst [vmem:[%s137 + $0xc8] sm:$0xff] %v385
        %444 = vst [vmem:[%s137 + $0xd0] sm:$0xff] %v390
        %445 = vst [vmem:[%s137 + $0xd8] sm:$0xff] %v395
        %446 = vst [vmem:[%s137 + $0xe0] sm:$0xff] %v400
        %447 = vst [vmem:[%s137 + $0xe8] sm:$0xff] %v405
        %448 = vst [vmem:[%s137 + $0xf0] sm:$0xff] %v410
        %449 = vst [vmem:[%s137 + $0xf8] sm:$0xff] %v415
        %s450 = sand.u32 %s71, 1
        %s451 = scalar_lea.sflag [#allocation3], %s450
        %s452 = sand.u32 %s71, 1
        %s453 = smul.addr %s452, 256
        %s454 = scalar_lea.vmem [#allocation2], %s453
        // Predicated region
        $region29: #{_inception_block_impl.1} parent=27 // pred_check
          %p455 = pneg %p81
        $region30: #{_inception_block_impl.1} parent=27 // pred_check_branch
          %457 = sbr.rel (%p455) target = $region32
        $region31: #{_inception_block_impl.1} parent=27 // pred_region
          %s458 = smul.u32 32, %s16
          %s460 = ssub.s32 4096, 4096
          %461 = vsyncadd %s451, %s460
          %s462 = smul.addr %s458, 128
          %s463 = scalar_lea.hbm %s2, %s462
          %s464 = sshll.u32 %s454, 4
          %s465 = int_to_ptr.vmem [resolvable:$true] %s464
          %470 = dma.vmem_to_hbm [thread:$0]  %s465, 4096, %s463, %s451, 128, 128, 8
        $region32: #{_inception_block_impl.1} parent=27 // pred_fallthru
          _
      $region28: #{_inception_block_impl.1} parent=5 // pred_fallthru
        _
      %p471 = scmp.le.s32.totalorder 2, %s11
      // Predicated region
      $region33: #{_inception_block_impl.1} parent=5 // pred_check
        %p472 = pneg %p471
      $region34: #{_inception_block_impl.1} parent=5 // pred_check_branch
        %474 = sbr.rel (%p472) target = $region36
      $region35: #{_inception_block_impl.1} parent=5 // pred_region
        %s475 = ssub.s32 %s11, 2
        // Predicated region
        $region37: #{_inception_block_impl.1} parent=35 // pred_check
          %p476 = pneg %p87
        $region38: #{_inception_block_impl.1} parent=35 // pred_check_branch
          %478 = sbr.rel (%p476) target = $region40
        $region39: #{_inception_block_impl.1} parent=35 // pred_region
          %s479 = sand.u32 %s72, 1
          %s480 = scalar_lea.sflag [#allocation3], %s479
          %s481 = sand.u32 %s72, 1
          %s482 = smul.addr %s481, 256
          %s483 = scalar_lea.vmem [#allocation2], %s482
          %484 = dma.done %s480, 4096
        $region40: #{_inception_block_impl.1} parent=35 // pred_fallthru
          _
      $region36: #{_inception_block_impl.1} parent=5 // pred_fallthru
        _
    $region6: #{_inception_block_impl.1} parent=1 // loop_footer
      %s15 = sadd.s32 1, %s11
    $region7: #{_inception_block_impl.1} parent=1 // loop_footer_branch
      %10 = sbr.rel target = $region3
    $region8: #{_inception_block_impl.1} parent=1 // loop_exit
      _
    %485 = vsyncpa [#allocation3], 1
    %s486 = scalar_lea.sflag [#allocation3], 1
    %487 = vsyncpa %s486, 1

</llo_original>
